<compile_context>
chip_gen: v7x
topology: tpu7x:2x2x1
jax: 0.10.0
libtpu: 0.0.40
codegen_flags: <defaults>
</compile_context>

<pallas_src>
import functools
import math

import jax
import jax.numpy as jnp
from jax import lax
from jax.experimental import pallas as pl
from jax.experimental.pallas import tpu as pltpu

_MIB = 1024 * 1024


# ---------------------------------------------------------------------------
# VMEM budget / tile pickers (divisor-exact so the wrapper never pads)
# ---------------------------------------------------------------------------
@functools.lru_cache(maxsize=1)
def _vmem_budget_bytes():
    """~75% of physical VMEM: 96 MiB on v5e/v6e (128 MiB), 48 MiB on v7x (64 MiB)."""
    cap = 64 * _MIB  # conservative fallback = v7x physical
    try:
        cap = int(getattr(pltpu.get_tpu_info(), "vmem_capacity_bytes", cap))
    except Exception:
        pass
    return (cap * 3) // 4


def _sublane_align(itemsize):
    # rows per sublane pack: f32 -> 8, bf16 -> 16, int8/fp8 -> 32
    return max(8, (4 // max(1, itemsize)) * 8)


def _largest_aligned_divisor(n, align, cap):
    t = (min(n, cap) // align) * align
    while t >= align:
        if n % t == 0:
            return t
        t -= align
    return None


def _pick_lane_tile(d_total, per_lane_bytes, budget_bytes):
    """Largest tn dividing d_total (multiple of 128, preferring multiples of 256 for
    the 2x256^2 MXU) such that per_lane_bytes * tn <= budget_bytes. Full D if it fits."""
    if d_total <= 128:
        return d_total
    cap = max(128, budget_bytes // max(1, per_lane_bytes))
    if d_total <= cap:
        return d_total  # full dim fits -> fewest grid steps
    t256 = _largest_aligned_divisor(d_total, 256, cap)
    t128 = _largest_aligned_divisor(d_total, 128, cap)
    if t128 is None:
        # TODO(synk): awkward D with no 128-aligned divisor; fall back to full D and
        # rely on the explicit vmem_limit headroom.
        return d_total
    if t256 is not None and 2 * t256 >= t128:
        return t256  # prefer 256-aligned when roughly equal
    return t128


def _pick_row_tile(s_total, per_row_bytes, align, budget_bytes, max_rows):
    """Largest row tile dividing s_total, aligned to the sublane packing, within budget."""
    cap = max(align, budget_bytes // max(1, per_row_bytes))
    cap = min(cap, max_rows)
    if s_total <= cap:
        return s_total
    t = _largest_aligned_divisor(s_total, align, cap)
    if t is None:
        # TODO(synk): awkward S with no aligned divisor; fall back to full S.
        return s_total
    return t


# ---------------------------------------------------------------------------
# Kernel 1: chunked adaLN linear   out[j] = e @ W6[j] + b6[j]   (e = silu(cond))
# ---------------------------------------------------------------------------
def _adaln_linear_kernel(e_ref, w_ref, b_ref, o_ref):
    # e_ref: (B, D) silu(cond), already in the weight dtype (SiLU hoisted out of
    # the grid loop).  w_ref: (1, D, tn)   b_ref: (1, 1, tn)   o_ref: (1, B, tn)
    y = jnp.dot(e_ref[...], w_ref[0], preferred_element_type=jnp.float32)
    y = y + b_ref[0].astype(jnp.float32)  # per-tile bias, (1, tn) broadcast
    o_ref[0] = y.astype(o_ref.dtype)


def adaln_linear(e, w6, b6, *, out_dtype=None):
    """e: (B, D) = silu(cond) in weight dtype; w6: (6, D, D); b6: (6, 1, D)
    -> (6, B, D) chunk-major output in out_dtype (default: e.dtype)."""
    B, D = e.shape
    out_dtype = jnp.dtype(out_dtype) if out_dtype is not None else jnp.dtype(e.dtype)
    budget = _vmem_budget_bytes()

    w_item = jnp.dtype(w6.dtype).itemsize
    b_item = jnp.dtype(b6.dtype).itemsize
    o_item = out_dtype.itemsize
    # Bytes that scale with tn (double-buffered weight / bias / output blocks).
    per_lane = 2 * (D * w_item + B * o_item + b_item)
    # The (B, D) activation block is re-fetched (double-buffered) every step.
    fixed = 2 * B * D * jnp.dtype(e.dtype).itemsize
    tn = _pick_lane_tile(D, per_lane, max(0, budget - fixed))
    n_sub = D // tn if D % tn == 0 else 1  # picker is divisor-exact; guard anyway

    return pl.pallas_call(
        _adaln_linear_kernel,
        out_shape=jax.ShapeDtypeStruct((6, B, D), out_dtype),
        grid=(6, n_sub),
        in_specs=[
            pl.BlockSpec((B, D), lambda j, n: (0, 0)),
            pl.BlockSpec((1, D, tn), lambda j, n: (j, 0, n)),
            pl.BlockSpec((1, 1, tn), lambda j, n: (j, 0, n)),
        ],
        out_specs=pl.BlockSpec((1, B, tn), lambda j, n: (j, 0, n)),
        compiler_params=pltpu.CompilerParams(
            dimension_semantics=("parallel", "parallel"),
            vmem_limit_bytes=budget),
    )(e, w6, b6)


# ---------------------------------------------------------------------------
# Kernel 2: LayerNorm (no affine) + adaLN modulation
# ---------------------------------------------------------------------------
def _adaln_modulate_kernel(x_ref, shift_ref, scale_ref, o_ref, *, eps):
    # x_ref: (1, ts, D)   shift_ref / scale_ref: (1, 1, D)   o_ref: (1, ts, D)
    x = x_ref[...].astype(jnp.float32)
    inv_d = jnp.float32(1.0 / x.shape[-1])
    sum_x = jnp.sum(x, axis=-1, keepdims=True)            # XLU lane reduce
    sum_x2 = jnp.sum(x * x, axis=-1, keepdims=True)
    mean = sum_x * inv_d
    var = sum_x2 * inv_d - mean * mean                    # E[x^2] - mean^2
    r = lax.rsqrt(var + eps)                              # EUP
    c = 1.0 + scale_ref[...].astype(jnp.float32)          # (1, 1, D)
    shift = shift_ref[...].astype(jnp.float32)
    # ((x - mean) * r) * c + shift with per-row factors folded: the full-tile
    # work is mul / sub / mul / add on broadcast operands.
    o_ref[...] = ((x * r - mean * r) * c + shift).astype(o_ref.dtype)


def adaln_modulate(x, shift, scale, *, eps=1e-6):
    """x: (B, S, D); shift/scale: (B, D) -> (B, S, D)."""
    B, S, D = x.shape
    budget = _vmem_budget_bytes()
    x_item = jnp.dtype(x.dtype).itemsize
    # Per-row bytes: in+out double-buffered blocks + ~3 f32 full-tile intermediates
    # (the in-kernel f32 upcast / products become Mosaic internal scratch).
    per_row = 4 * D * x_item + 3 * D * 4
    fixed = 2 * 2 * D * (x_item + 4)  # shift/scale double-buffered blocks (small)
    align = _sublane_align(x_item)

    # Keep >= 2 parallel grid steps so the v7x megacore doesn't idle a core.
    max_rows = S
    if B == 1 and S >= 2 * align:
        max_rows = max(align, ((S // 2) // align) * align)
    ts = _pick_row_tile(S, per_row, align, max(0, budget - fixed), max_rows)
    n_s = S // ts if S % ts == 0 else 1

    shift3 = shift.reshape(B, 1, D)
    scale3 = scale.reshape(B, 1, D)
    return pl.pallas_call(
        functools.partial(_adaln_modulate_kernel, eps=eps),
        out_shape=jax.ShapeDtypeStruct((B, S, D), x.dtype),
        grid=(B, n_s),
        in_specs=[
            pl.BlockSpec((1, ts, D), lambda b, s: (b, s, 0)),
            pl.BlockSpec((1, 1, D), lambda b, s: (b, 0, 0)),
            pl.BlockSpec((1, 1, D), lambda b, s: (b, 0, 0)),
        ],
        out_specs=pl.BlockSpec((1, ts, D), lambda b, s: (b, s, 0)),
        compiler_params=pltpu.CompilerParams(
            dimension_semantics=("parallel", "parallel"),
            vmem_limit_bytes=budget),
    )(x, shift3, scale3)


# ---------------------------------------------------------------------------
# CombinedTimestepLabelEmbeddings front-end (plain JAX)
# ---------------------------------------------------------------------------
def _sinusoidal_timestep_proj(timesteps, num_channels=256, max_period=10000.0,
                              downscale_freq_shift=1.0, flip_sin_to_cos=True):
    half = num_channels // 2
    exponent = -math.log(max_period) * jnp.arange(half, dtype=jnp.float32)
    exponent = exponent / (half - downscale_freq_shift)
    freqs = jnp.exp(exponent)
    args = timesteps.astype(jnp.float32)[:, None] * freqs[None, :]
    emb = jnp.concatenate([jnp.sin(args), jnp.cos(args)], axis=-1)
    if flip_sin_to_cos:
        emb = jnp.concatenate([emb[:, half:], emb[:, :half]], axis=-1)
    return emb


def combined_timestep_label_embedding(timestep, class_labels, params):
    # TODO(synk): tiny (B, 256) MLP + label-table gather kept in plain JAX; no win from Pallas.
    t_proj = _sinusoidal_timestep_proj(timestep)
    h = t_proj @ params["te_w1"] + params["te_b1"]
    h = jax.nn.silu(h)
    t_emb = h @ params["te_w2"] + params["te_b2"]
    c_emb = params["label_table"][class_labels]
    return (t_emb + c_emb).astype(jnp.float32)


# ---------------------------------------------------------------------------
# Full module forward + reference
# ---------------------------------------------------------------------------
def prepare_adaln_linear_params(w_t, bias, dtype=None):
    """One-time param prep. w_t: (D, 6D) = PyTorch linear.weight.T; bias: (6D,).
    Returns chunk-major layouts: w6[j] = w_t[:, j*D:(j+1)*D] -> (6, D, D); b6 -> (6, 1, D).
    Pass dtype=jnp.bfloat16 to halve K1's weight-streaming bytes."""
    D = w_t.shape[0]
    w6 = w_t.reshape(D, 6, D).transpose(1, 0, 2)
    b6 = bias.reshape(6, 1, D)
    if dtype is not None:
        w6 = w6.astype(dtype)
        b6 = b6.astype(dtype)
    return w6, b6


def ada_layer_norm_zero(x, timestep, class_labels, params):
    cond = combined_timestep_label_embedding(timestep, class_labels, params)   # (B, D)
    # SiLU + cast hoisted out of the K1 grid loop: done once on a tiny (B, D) tensor.
    e = jax.nn.silu(cond).astype(params["w6"].dtype)
    chunks = adaln_linear(e, params["w6"], params["b6"], out_dtype=x.dtype)     # (6, B, D)
    shift_msa, scale_msa, gate_msa = chunks[0], chunks[1], chunks[2]
    shift_mlp, scale_mlp, gate_mlp = chunks[3], chunks[4], chunks[5]
    x_out = adaln_modulate(x, shift_msa, scale_msa)
    return x_out, gate_msa, shift_mlp, scale_mlp, gate_mlp


def ada_layer_norm_zero_reference(x, timestep, class_labels, params, w_t, bias):
    cond = combined_timestep_label_embedding(timestep, class_labels, params)
    emb = jax.nn.silu(cond) @ w_t + bias                                       # (B, 6D)
    D = x.shape[-1]
    shift_msa, scale_msa, gate_msa, shift_mlp, scale_mlp, gate_mlp = [
        emb[:, i * D:(i + 1) * D] for i in range(6)]
    mean = jnp.mean(x, axis=-1, keepdims=True)
    var = jnp.mean((x - mean) ** 2, axis=-1, keepdims=True)
    ln = (x - mean) / jnp.sqrt(var + 1e-6)
    x_out = ln * (1.0 + scale_msa[:, None, :]) + shift_msa[:, None, :]
    return x_out, gate_msa, shift_mlp, scale_mlp, gate_mlp


if __name__ == "__main__":
    B, S, D = 2, 8, 32
    num_classes = 10

    key = jax.random.PRNGKey(0)
    ks = jax.random.split(key, 6)

    x = jax.random.normal(ks[0], (B, S, D), dtype=jnp.float32)
    timestep = jnp.array([3.0, 7.0], dtype=jnp.float32)
    class_labels = jnp.array([1, 4], dtype=jnp.int32)

    # adaLN linear params (PyTorch layout: weight (6D, D), stored here transposed).
    w_t = jax.random.normal(ks[1], (D, 6 * D), dtype=jnp.float32) * 0.05
    bias = jax.random.normal(ks[2], (6 * D,), dtype=jnp.float32) * 0.01

    # CombinedTimestepLabelEmbeddings params (timestep MLP 256->D->D, label table).
    params = {
        "te_w1": jax.random.normal(ks[3], (256, D), dtype=jnp.float32) * 0.05,
        "te_b1": jnp.zeros((D,), jnp.float32),
        "te_w2": jax.random.normal(ks[4], (D, D), dtype=jnp.float32) * 0.05,
        "te_b2": jnp.zeros((D,), jnp.float32),
        "label_table": jax.random.normal(ks[5], (num_classes + 1, D), jnp.float32) * 0.05,
    }

    names = ["x", "gate_msa", "shift_mlp", "scale_mlp", "gate_mlp"]

    # ---- float32 correctness check (tight tolerance) ----
    params["w6"], params["b6"] = prepare_adaln_linear_params(w_t, bias)
    outs = jax.jit(ada_layer_norm_zero)(x, timestep, class_labels, params)
    outs = jax.block_until_ready(outs)
    refs = ada_layer_norm_zero_reference(x, timestep, class_labels, params, w_t, bias)
    for name, got, want in zip(names, outs, refs):
        assert got.shape == want.shape, (name, got.shape, want.shape)
        err = float(jnp.max(jnp.abs(got - want)))
        assert jnp.allclose(got, want, atol=5e-5, rtol=5e-5), (name, err)

    # ---- bfloat16 weights + activations smoke check (loose tolerance) ----
    w6_bf, b6_bf = prepare_adaln_linear_params(w_t, bias, dtype=jnp.bfloat16)
    params_bf = dict(params, w6=w6_bf, b6=b6_bf)
    x_bf = x.astype(jnp.bfloat16)
    outs_bf = jax.jit(ada_layer_norm_zero)(x_bf, timestep, class_labels, params_bf)
    outs_bf = jax.block_until_ready(outs_bf)
    refs_bf = ada_layer_norm_zero_reference(
        x_bf.astype(jnp.float32), timestep, class_labels, params,
        w_t.astype(jnp.bfloat16).astype(jnp.float32),
        bias.astype(jnp.bfloat16).astype(jnp.float32))
    for name, got, want in zip(names, outs_bf, refs_bf):
        assert got.shape == want.shape, (name, got.shape, want.shape)
        err = float(jnp.max(jnp.abs(got.astype(jnp.float32) - want)))
        assert jnp.allclose(got.astype(jnp.float32), want, atol=3e-2, rtol=3e-2), (name, err)

    print("KERNEL_OK")
</pallas_src>

<mosaic_0001>
module attributes {stable_mosaic.version = 11 : i64} {
  func.func @_adaln_modulate_kernel(%arg0: i32, %arg1: i32, %arg2: memref<1x8x32xf32, #tpu.memory_space<vmem>>, %arg3: memref<1x1x32xf32, #tpu.memory_space<vmem>>, %arg4: memref<1x1x32xf32, #tpu.memory_space<vmem>>, %arg5: memref<1x8x32xf32, #tpu.memory_space<vmem>>) attributes {dimension_semantics = [#tpu.dimension_semantics<parallel>, #tpu.dimension_semantics<parallel>], iteration_bounds = array<i64: 2, 1>, scalar_prefetch = 0 : i64, scratch_operands = 0 : i64, tpu.core_type = #tpu.core_type<tc>, window_params = [{transform_indices = @transform_0, window_bounds = array<i64: 1, 8, 32>}, {transform_indices = @transform_1, window_bounds = array<i64: 1, 1, 32>}, {transform_indices = @transform_2, window_bounds = array<i64: 1, 1, 32>}, {transform_indices = @transform_3, window_bounds = array<i64: 1, 8, 32>}]} {
    %c0 = arith.constant 0 : index
    %c0_0 = arith.constant 0 : index
    %c0_1 = arith.constant 0 : index
    %0 = vector.load %arg2[%c0, %c0_0, %c0_1] : memref<1x8x32xf32, #tpu.memory_space<vmem>>, vector<1x8x32xf32>
    %cst = arith.constant dense<0.000000e+00> : vector<1x8xf32>
    %1 = vector.multi_reduction <add>, %0, %cst [2] : vector<1x8x32xf32> to vector<1x8xf32>
    %2 = vector.shape_cast %1 : vector<1x8xf32> to vector<1x8x1xf32>
    %3 = arith.mulf %0, %0 : vector<1x8x32xf32>
    %cst_2 = arith.constant dense<0.000000e+00> : vector<1x8xf32>
    %4 = vector.multi_reduction <add>, %3, %cst_2 [2] : vector<1x8x32xf32> to vector<1x8xf32>
    %5 = vector.shape_cast %4 : vector<1x8xf32> to vector<1x8x1xf32>
    %cst_3 = arith.constant 3.125000e-02 : f32
    %6 = vector.broadcast %cst_3 : f32 to vector<1x8x1xf32>
    %7 = arith.mulf %2, %6 : vector<1x8x1xf32>
    %cst_4 = arith.constant 3.125000e-02 : f32
    %8 = vector.broadcast %cst_4 : f32 to vector<1x8x1xf32>
    %9 = arith.mulf %5, %8 : vector<1x8x1xf32>
    %10 = arith.mulf %7, %7 : vector<1x8x1xf32>
    %11 = arith.subf %9, %10 : vector<1x8x1xf32>
    %cst_5 = arith.constant 9.99999997E-7 : f32
    %12 = vector.broadcast %cst_5 : f32 to vector<1x8x1xf32>
    %13 = arith.addf %11, %12 : vector<1x8x1xf32>
    %14 = math.rsqrt %13 : vector<1x8x1xf32>
    %c0_6 = arith.constant 0 : index
    %c0_7 = arith.constant 0 : index
    %c0_8 = arith.constant 0 : index
    %15 = vector.load %arg4[%c0_6, %c0_7, %c0_8] : memref<1x1x32xf32, #tpu.memory_space<vmem>>, vector<1x1x32xf32>
    %cst_9 = arith.constant 1.000000e+00 : f32
    %16 = vector.broadcast %cst_9 : f32 to vector<1x1x32xf32>
    %17 = arith.addf %16, %15 : vector<1x1x32xf32>
    %c0_10 = arith.constant 0 : index
    %c0_11 = arith.constant 0 : index
    %c0_12 = arith.constant 0 : index
    %18 = vector.load %arg3[%c0_10, %c0_11, %c0_12] : memref<1x1x32xf32, #tpu.memory_space<vmem>>, vector<1x1x32xf32>
    %19 = vector.broadcast %14 : vector<1x8x1xf32> to vector<1x8x32xf32>
    %20 = arith.mulf %0, %19 : vector<1x8x32xf32>
    %21 = arith.mulf %7, %14 : vector<1x8x1xf32>
    %22 = vector.broadcast %21 : vector<1x8x1xf32> to vector<1x8x32xf32>
    %23 = arith.subf %20, %22 : vector<1x8x32xf32>
    %24 = vector.broadcast %17 : vector<1x1x32xf32> to vector<1x8x32xf32>
    %25 = arith.mulf %23, %24 : vector<1x8x32xf32>
    %26 = vector.broadcast %18 : vector<1x1x32xf32> to vector<1x8x32xf32>
    %27 = arith.addf %25, %26 : vector<1x8x32xf32>
    %c0_13 = arith.constant 0 : index
    %c0_14 = arith.constant 0 : index
    %c0_15 = arith.constant 0 : index
    %28 = vector.load %arg5[%c0_13, %c0_14, %c0_15] : memref<1x8x32xf32, #tpu.memory_space<vmem>>, vector<1x8x32xf32>
    tpu.vector_store %arg5[%c0_13, %c0_14, %c0_15], %27 {strides = array<i32>} : memref<1x8x32xf32, #tpu.memory_space<vmem>>, vector<1x8x32xf32>,
    return
  }
  func.func @transform_0(%arg0: i32, %arg1: i32) -> (i32, i32, i32) {
    %c0_i32 = arith.constant 0 : i32
    %c0_i32_0 = arith.constant 0 : i32
    return %arg0, %arg1, %c0_i32 : i32, i32, i32
  }
  func.func @transform_1(%arg0: i32, %arg1: i32) -> (i32, i32, i32) {
    %c0_i32 = arith.constant 0 : i32
    %c0_i32_0 = arith.constant 0 : i32
    %c0_i32_1 = arith.constant 0 : i32
    return %arg0, %c0_i32, %c0_i32_0 : i32, i32, i32
  }
  func.func @transform_2(%arg0: i32, %arg1: i32) -> (i32, i32, i32) {
    %c0_i32 = arith.constant 0 : i32
    %c0_i32_0 = arith.constant 0 : i32
    %c0_i32_1 = arith.constant 0 : i32
    return %arg0, %c0_i32, %c0_i32_0 : i32, i32, i32
  }
  func.func @transform_3(%arg0: i32, %arg1: i32) -> (i32, i32, i32) {
    %c0_i32 = arith.constant 0 : i32
    %c0_i32_0 = arith.constant 0 : i32
    return %arg0, %arg1, %c0_i32 : i32, i32, i32
  }
}

module attributes {stable_mosaic.version = 11 : i64} {
  func.func @_adaln_linear_kernel(%arg0: i32, %arg1: i32, %arg2: memref<2x32xf32, #tpu.memory_space<vmem>>, %arg3: memref<1x32x32xf32, #tpu.memory_space<vmem>>, %arg4: memref<1x1x32xf32, #tpu.memory_space<vmem>>, %arg5: memref<1x2x32xf32, #tpu.memory_space<vmem>>) attributes {dimension_semantics = [#tpu.dimension_semantics<parallel>, #tpu.dimension_semantics<parallel>], iteration_bounds = array<i64: 6, 1>, scalar_prefetch = 0 : i64, scratch_operands = 0 : i64, tpu.core_type = #tpu.core_type<tc>, window_params = [{pipeline_mode = #tpu.pipeline_mode<synchronous>, transform_indices = @transform_0, window_bounds = array<i64: 2, 32>}, {transform_indices = @transform_1, window_bounds = array<i64: 1, 32, 32>}, {transform_indices = @transform_2, window_bounds = array<i64: 1, 1, 32>}, {transform_indices = @transform_3, window_bounds = array<i64: 1, 2, 32>}]} {
    %c0 = arith.constant 0 : index
    %c0_0 = arith.constant 0 : index
    %0 = vector.load %arg2[%c0, %c0_0] : memref<2x32xf32, #tpu.memory_space<vmem>>, vector<2x32xf32>
    %c0_1 = arith.constant 0 : index
    %c0_2 = arith.constant 0 : index
    %c0_3 = arith.constant 0 : index
    %1 = vector.load %arg3[%c0_1, %c0_2, %c0_3] : memref<1x32x32xf32, #tpu.memory_space<vmem>>, vector<1x32x32xf32>
    %2 = vector.shape_cast %1 : vector<1x32x32xf32> to vector<32x32xf32>
    %cst = arith.constant dense<0.000000e+00> : vector<2x32xf32>
    %3 = tpu.matmul %0, %2, %cst {dimension_numbers = #tpu.dot_dimension_numbers<[1], [0], [0], [1], [0, 0, 1, 1], [], []>} : vector<2x32xf32>, vector<32x32xf32>, vector<2x32xf32> -> vector<2x32xf32>
    %c0_4 = arith.constant 0 : index
    %c0_5 = arith.constant 0 : index
    %c0_6 = arith.constant 0 : index
    %4 = vector.load %arg4[%c0_4, %c0_5, %c0_6] : memref<1x1x32xf32, #tpu.memory_space<vmem>>, vector<1x1x32xf32>
    %5 = vector.shape_cast %4 : vector<1x1x32xf32> to vector<1x32xf32>
    %6 = vector.broadcast %5 : vector<1x32xf32> to vector<2x32xf32>
    %7 = arith.addf %3, %6 : vector<2x32xf32>
    %c0_7 = arith.constant 0 : index
    %c0_8 = arith.constant 0 : index
    %c0_9 = arith.constant 0 : index
    %8 = vector.load %arg5[%c0_7, %c0_8, %c0_9] : memref<1x2x32xf32, #tpu.memory_space<vmem>>, vector<1x2x32xf32>
    %9 = vector.shape_cast %8 : vector<1x2x32xf32> to vector<2x32xf32>
    %10 = vector.shape_cast %7 : vector<2x32xf32> to vector<1x2x32xf32>
    tpu.vector_store %arg5[%c0_7, %c0_8, %c0_9], %10 {strides = array<i32>} : memref<1x2x32xf32, #tpu.memory_space<vmem>>, vector<1x2x32xf32>,
    return
  }
  func.func @transform_0(%arg0: i32, %arg1: i32) -> (i32, i32) {
    %c0_i32 = arith.constant 0 : i32
    %c0_i32_0 = arith.constant 0 : i32
    %c0_i32_1 = arith.constant 0 : i32
    return %c0_i32, %c0_i32_0 : i32, i32
  }
  func.func @transform_1(%arg0: i32, %arg1: i32) -> (i32, i32, i32) {
    %c0_i32 = arith.constant 0 : i32
    %c0_i32_0 = arith.constant 0 : i32
    return %arg0, %c0_i32, %arg1 : i32, i32, i32
  }
  func.func @transform_2(%arg0: i32, %arg1: i32) -> (i32, i32, i32) {
    %c0_i32 = arith.constant 0 : i32
    %c0_i32_0 = arith.constant 0 : i32
    return %arg0, %c0_i32, %arg1 : i32, i32, i32
  }
  func.func @transform_3(%arg0: i32, %arg1: i32) -> (i32, i32, i32) {
    %c0_i32 = arith.constant 0 : i32
    %c0_i32_0 = arith.constant 0 : i32
    return %arg0, %c0_i32, %arg1 : i32, i32, i32
  }
}

</mosaic_0001>

<llo_original>
// kernel: ada_layer_norm_zero.2
$region0: #{ada_layer_norm_zero.2}
  #allocation0 [shape = 'u32[]', space=smem, size = 0x4, offset = 0x4, fixed_abs, tag = 'smem constant byte address 0x4 - core index']
  #allocation1 [shape = 'u32[144,128]{1,0:T(1,128)}', space=vmem, size = 0x12000, scoped, tag = 'internal scratch']
  %s0 = inlined_call_operand.vmem [shape: f32[2,32], index: 0, kind: input, shape index: {}]
  %s1 = inlined_call_operand.hbm [shape: f32[6,32,32], index: 1, kind: input, shape index: {}]
  %s2 = inlined_call_operand.vmem [shape: f32[6,1,32], index: 2, kind: input, shape index: {}]
  %s3 = inlined_call_operand.vmem [shape: f32[6,2,32], index: 3, kind: output, shape index: {}]
  %s4 = sld [smem:[#allocation0]]
  $region49: #{ada_layer_norm_zero.2} parent=0
    _
  %s6 = ssub.s32 1, %s4
  %s7 = scalar_select 0, %s6, %s4
  $region1: #{ada_layer_norm_zero.2} parent=0
    #allocation2 [shape = 'u8[32768]{0}', space=vmem, size = 0x8000, scoped, tag = 'input window, operand 1']
    #allocation3 [shape = 's32[2]{0}', space=sflag, size = 0x8, scoped, tag = 'scoped memory for ada_layer_norm_zero.2']
    %8 = vsyncpa [#allocation3], 0
    %s9 = scalar_lea.sflag [#allocation3], 1
    %10 = vsyncpa %s9, 0
    loop: start=0, step=1, limit=8
    $region2: #{ada_layer_norm_zero.2} parent=1 // loop_pre_header
      _
    $region3: #{ada_layer_norm_zero.2} parent=1 // loop_header
      %s12 = sphi 0, %s16
      %p13 = scmp.ge.s32.totalorder %s12, 8
      %s19 = sphi 0, %s31
      %s20 = sphi 0, %s27
      %s21 = sphi 0, %s19
      %s22 = sphi 0, %s20
      %s23 = sphi 0, %s21
      %s24 = sphi 0, %s22
      %s32 = sphi 0, %s32
      %s34 = sphi 0, %s32
      %s35 = sphi 0, %s34
      %s49 = sphi 0, %s35
      %s57 = sphi 0, %s59
      %s60 = sphi 0, %s57
      %s61 = sphi 0, %s60
      %s77 = sphi 0, %s61
      %s85 = sphi 0, %s87
      %s88 = sphi 0, %s85
      %s89 = sphi 0, %s88
      %s105 = sphi 0, %s89
      %s113 = sphi 0, %s115
      %s116 = sphi 0, %s113
      %s117 = sphi 0, %s116
      %s133 = sphi 0, %s117
    $region4: #{ada_layer_norm_zero.2} parent=1 // loop_header_branch
      %15 = sbr.rel (%p13) target = $region8
    $region5: #{ada_layer_norm_zero.2} parent=1 // loop_body
      %s17 = ssub.s32 %s12, 1
      %s18 = ssub.s32 %s12, 2
      %s25 = sadd.s32 1, %s20
      %p26 = scmp.ge.s32.totalorder %s25, 1
      %s27 = scalar_select %p26, 0, %s25
      %s28 = sadd.s32 1, %s19
      %s29 = scalar_select %p26, %s28, %s19
      %p30 = scmp.ge.s32.totalorder %s29, 6
      %s31 = scalar_select %p30, 0, %s29
      %s33 = sadd.s32 %s32, 1
      %p36 = scmp.eq.s32.totalorder %s12, 5
      %p37 = scmp.ne.s32.totalorder %s32, %s34
      %p38 = scmp.eq.s32.totalorder %s12, 0
      %p39 = por %p37, %p38
      %p40 = scmp.ne.s32.totalorder %s32, %s34
      %p41 = scmp.eq.s32.totalorder %s17, 5
      %p42 = por %p40, %p41
      %p43 = scmp.ne.s32.totalorder %s34, %s35
      %p44 = scmp.eq.s32.totalorder %s17, 0
      %p45 = por %p43, %p44
      %p46 = scmp.ne.s32.totalorder %s34, %s35
      %p47 = scmp.eq.s32.totalorder %s18, 5
      %p48 = por %p46, %p47
      %p50 = scmp.ne.s32.totalorder %s35, %s49
      %p51 = scmp.eq.s32.totalorder %s18, 0
      %p52 = por %p50, %p51
      %s53 = ssub.s32 %s19, %s31
      %s54 = ssub.s32 %s20, %s27
      %s55 = sor.u32 %s53, %s54
      %p56 = scmp.eq.s32.totalorder %s55, 0
      %s58 = sadd.s32 %s57, 1
      %s59 = scalar_select %p56, %s57, %s58
      %p62 = pneg %p56
      %p63 = scmp.eq.s32.totalorder %s12, 5
      %p64 = por %p62, %p63
      %p65 = scmp.ne.s32.totalorder %s57, %s60
      %p66 = scmp.eq.s32.totalorder %s12, 0
      %p67 = por %p65, %p66
      %p68 = scmp.ne.s32.totalorder %s57, %s60
      %p69 = scmp.eq.s32.totalorder %s17, 5
      %p70 = por %p68, %p69
      %p71 = scmp.ne.s32.totalorder %s60, %s61
      %p72 = scmp.eq.s32.totalorder %s17, 0
      %p73 = por %p71, %p72
      %p74 = scmp.ne.s32.totalorder %s60, %s61
      %p75 = scmp.eq.s32.totalorder %s18, 5
      %p76 = por %p74, %p75
      %p78 = scmp.ne.s32.totalorder %s61, %s77
      %p79 = scmp.eq.s32.totalorder %s18, 0
      %p80 = por %p78, %p79
      %s81 = ssub.s32 %s19, %s31
      %s82 = ssub.s32 %s20, %s27
      %s83 = sor.u32 %s81, %s82
      %p84 = scmp.eq.s32.totalorder %s83, 0
      %s86 = sadd.s32 %s85, 1
      %s87 = scalar_select %p84, %s85, %s86
      %p90 = pneg %p84
      %p91 = scmp.eq.s32.totalorder %s12, 5
      %p92 = por %p90, %p91
      %p93 = scmp.ne.s32.totalorder %s85, %s88
      %p94 = scmp.eq.s32.totalorder %s12, 0
      %p95 = por %p93, %p94
      %p96 = scmp.ne.s32.totalorder %s85, %s88
      %p97 = scmp.eq.s32.totalorder %s17, 5
      %p98 = por %p96, %p97
      %p99 = scmp.ne.s32.totalorder %s88, %s89
      %p100 = scmp.eq.s32.totalorder %s17, 0
      %p101 = por %p99, %p100
      %p102 = scmp.ne.s32.totalorder %s88, %s89
      %p103 = scmp.eq.s32.totalorder %s18, 5
      %p104 = por %p102, %p103
      %p106 = scmp.ne.s32.totalorder %s89, %s105
      %p107 = scmp.eq.s32.totalorder %s18, 0
      %p108 = por %p106, %p107
      %s109 = ssub.s32 %s19, %s31
      %s110 = ssub.s32 %s20, %s27
      %s111 = sor.u32 %s109, %s110
      %p112 = scmp.eq.s32.totalorder %s111, 0
      %s114 = sadd.s32 %s113, 1
      %s115 = scalar_select %p112, %s113, %s114
      %p118 = pneg %p112
      %p119 = scmp.eq.s32.totalorder %s12, 5
      %p120 = por %p118, %p119
      %p121 = scmp.ne.s32.totalorder %s113, %s116
      %p122 = scmp.eq.s32.totalorder %s12, 0
      %p123 = por %p121, %p122
      %p124 = scmp.ne.s32.totalorder %s113, %s116
      %p125 = scmp.eq.s32.totalorder %s17, 5
      %p126 = por %p124, %p125
      %p127 = scmp.ne.s32.totalorder %s116, %s117
      %p128 = scmp.eq.s32.totalorder %s17, 0
      %p129 = por %p127, %p128
      %p130 = scmp.ne.s32.totalorder %s116, %s117
      %p131 = scmp.eq.s32.totalorder %s18, 5
      %p132 = por %p130, %p131
      %p134 = scmp.ne.s32.totalorder %s117, %s133
      %p135 = scmp.eq.s32.totalorder %s18, 0
      %p136 = por %p134, %p135
      %p137 = scmp.le.s32.totalorder 1, %s12
      %p138 = scmp.lt.s32.totalorder %s12, 7
      %p139 = pnand %p137, %p138
      %p140 = pneg %p139
      // Predicated region
      $region9: #{ada_layer_norm_zero.2} parent=5 // pred_check
        _
      $region10: #{ada_layer_norm_zero.2} parent=5 // pred_check_branch
        %142 = sbr.rel (%p139) target = $region12
      $region11: #{ada_layer_norm_zero.2} parent=5 // pred_region
        %s143 = ssub.s32 %s12, 1
        // Predicated region
        $region13: #{ada_layer_norm_zero.2} parent=11 // pred_check
          %p144 = pneg %p45
        $region14: #{ada_layer_norm_zero.2} parent=11 // pred_check_branch
          %146 = sbr.rel (%p144) target = $region16
        $region15: #{ada_layer_norm_zero.2} parent=11 // pred_region
          _
        $region16: #{ada_layer_norm_zero.2} parent=11 // pred_fallthru
          _
      $region12: #{ada_layer_norm_zero.2} parent=5 // pred_fallthru
        _
      %p147 = scmp.lt.s32.totalorder %s12, 6
      // Predicated region
      $region17: #{ada_layer_norm_zero.2} parent=5 // pred_check
        %p148 = pneg %p147
      $region18: #{ada_layer_norm_zero.2} parent=5 // pred_check_branch
        %150 = sbr.rel (%p148) target = $region20
      $region19: #{ada_layer_norm_zero.2} parent=5 // pred_region
        // Predicated region
        $region21: #{ada_layer_norm_zero.2} parent=19 // pred_check
          %p151 = pneg %p67
        $region22: #{ada_layer_norm_zero.2} parent=19 // pred_check_branch
          %153 = sbr.rel (%p151) target = $region24
        $region23: #{ada_layer_norm_zero.2} parent=19 // pred_region
          %s154 = sand.u32 %s57, 1
          %s155 = scalar_lea.sflag [#allocation3], %s154
          %s156 = sand.u32 %s57, 1
          %s157 = smul.addr %s156, 32
          %s158 = scalar_lea.vmem [#allocation2], %s157
          %s160 = ssub.s32 512, 512
          %161 = vsyncadd %s155, %s160
          %s162 = smul.addr %s19, 4
          %s163 = sadd.s32 %s20, %s162
          %s164 = smul.addr %s163, 128
          %s165 = scalar_lea.hbm %s1, %s164
          %s166 = sshll.u32 %s158, 4
          %s167 = int_to_ptr.vmem [resolvable:$true] %s166
          %172 = dma.hbm_to_vmem [thread:$0]  %s165, 512, %s167, %s155, 128, 128, 8
        $region24: #{ada_layer_norm_zero.2} parent=19 // pred_fallthru
          _
        // Predicated region
        $region25: #{ada_layer_norm_zero.2} parent=19 // pred_check
          %p173 = pneg %p95
        $region26: #{ada_layer_norm_zero.2} parent=19 // pred_check_branch
          %175 = sbr.rel (%p173) target = $region28
        $region27: #{ada_layer_norm_zero.2} parent=19 // pred_region
          %p176 = scmp.lt.s32.totalorder %s19, 5
          %s177 = scalar_select %p176, %s19, 5
          %p178 = scmp.lt.s32.totalorder %s20, 0
          %s179 = scalar_select %p178, %s20, 0
          %s180 = sadd.s32 %s179, %s177
          %s181 = scalar_lea.vmem %s2, %s180
        $region28: #{ada_layer_norm_zero.2} parent=19 // pred_fallthru
          _
      $region20: #{ada_layer_norm_zero.2} parent=5 // pred_fallthru
        _
      %p182 = scmp.le.s32.totalorder 1, %s12
      %p183 = scmp.lt.s32.totalorder %s12, 7
      %p184 = pnand %p182, %p183
      %p185 = pneg %p184
      // Predicated region
      $region29: #{ada_layer_norm_zero.2} parent=5 // pred_check
        _
      $region30: #{ada_layer_norm_zero.2} parent=5 // pred_check_branch
        %187 = sbr.rel (%p184) target = $region32
      $region31: #{ada_layer_norm_zero.2} parent=5 // pred_region
        %s188 = ssub.s32 %s12, 1
        %s189 = sand.u32 %s60, 1
        %s190 = scalar_lea.sflag [#allocation3], %s189
        %s191 = sand.u32 %s60, 1
        %s192 = smul.addr %s191, 32
        %s193 = scalar_lea.vmem [#allocation2], %s192
        // Predicated region
        $region33: #{ada_layer_norm_zero.2} parent=31 // pred_check
          %p194 = pneg %p73
        $region34: #{ada_layer_norm_zero.2} parent=31 // pred_check_branch
          %196 = sbr.rel (%p194) target = $region36
        $region35: #{ada_layer_norm_zero.2} parent=31 // pred_region
          %197 = dma.done %s190, 512
        $region36: #{ada_layer_norm_zero.2} parent=31 // pred_fallthru
          _
        %p198 = pneg %p45
        %p199 = pneg %p42
        %s200 = sand.u32 %s60, 1
        %s201 = scalar_lea.sflag [#allocation3], %s200
        %s202 = sand.u32 %s60, 1
        %s203 = smul.addr %s202, 32
        %s204 = scalar_lea.vmem [#allocation2], %s203
        %p205 = pneg %p73
        %p206 = pneg %p70
        %p207 = scmp.lt.s32.totalorder %s21, 5
        %s208 = scalar_select %p207, %s21, 5
        %p209 = scmp.lt.s32.totalorder %s22, 0
        %s210 = scalar_select %p209, %s22, 0
        %s211 = sadd.s32 %s210, %s208
        %s212 = scalar_lea.vmem %s2, %s211
        %p213 = pneg %p101
        %p214 = pneg %p98
        %p215 = pneg %p129
        %p216 = pneg %p126
        %p217 = scmp.lt.s32.totalorder %s21, 5
        %s218 = scalar_select %p217, %s21, 5
        %p219 = scmp.lt.s32.totalorder %s22, 0
        %s220 = scalar_select %p219, %s22, 0
        %s221 = sadd.s32 %s220, %s218
        %s222 = smul.addr %s221, 2
        %s223 = scalar_lea.vmem %s3, %s222
        %p224 = scmp.lt.s32.totalorder %s21, 5
        %s225 = scalar_select %p224, %s21, 5
        %p226 = scmp.lt.s32.totalorder %s22, 0
        %s227 = scalar_select %p226, %s22, 0
        %s228 = sadd.s32 %s227, %s225
        %s229 = scalar_lea.vmem %s2, %s228
        %p230 = scmp.lt.s32.totalorder %s21, 5
        %s231 = scalar_select %p230, %s21, 5
        %p232 = scmp.lt.s32.totalorder %s22, 0
        %s233 = scalar_select %p232, %s22, 0
        %s234 = sadd.s32 %s233, %s231
        %s235 = smul.addr %s234, 2
        %s236 = scalar_lea.vmem %s3, %s235
        %v237 = vld [vmem:[%s0] sm:$0x3]
        %v238 = vld [vmem:[%s193] sm:$0xff]
        %v239 = vld [vmem:[%s193 + $0x8] sm:$0xff]
        %v240 = vld [vmem:[%s193 + $0x10] sm:$0xff]
        %v241 = vld [vmem:[%s193 + $0x18] sm:$0xff]
        %v242 = vld [vmem:[%s229] sm:$0x1]
        %v244 = vlaneseq
        %v245 = vshrl.u32 %v244, 7
        %v246 = vsub.s32 0, %v245
        %v247 = vrot.slane %v242, %v246
        %vm249 = vcmask 261120
        %v251 = vsel %vm249, %v237, 0
        %253 = vmatprep.subr.mxu0 0.0
        %254 = vmatpush1.msra.mxu0 %v238
        %255 = vmatprep.subr.mxu0 0.0
        %256 = vmatpush1.msra.mxu0 %v239
        %257 = vmatprep.subr.mxu0 0.0
        %258 = vmatpush1.msra.mxu0 %v240
        %259 = vmatprep.subr.mxu0 0.0
        %260 = vmatpush1.msra.mxu0 %v241
        %261 = vmatprep.subr.mxu0 0.0
        %262 = vmatpush1.msra.mxu0 0.0
        %263 = vmatprep.subr.mxu0 0.0
        %264 = vmatpush1.msra.mxu0 0.0
        %265 = vmatprep.subr.mxu0 0.0
        %266 = vmatpush1.msra.mxu0 0.0
        %267 = vmatprep.subr.mxu0 0.0
        %268 = vmatpush1.msra.mxu0 0.0
        %269 = vmatprep.subr.mxu0 0.0
        %270 = vmatpush1.msra.mxu0 0.0
        %271 = vmatprep.subr.mxu0 0.0
        %272 = vmatpush1.msra.mxu0 0.0
        %273 = vmatprep.subr.mxu0 0.0
        %274 = vmatpush1.msra.mxu0 0.0
        %275 = vmatprep.subr.mxu0 0.0
        %276 = vmatpush1.msra.mxu0 0.0
        %277 = vmatprep.subr.mxu0 0.0
        %278 = vmatpush1.msra.mxu0 0.0
        %279 = vmatprep.subr.mxu0 0.0
        %280 = vmatpush1.msra.mxu0 0.0
        %281 = vmatprep.subr.mxu0 0.0
        %282 = vmatpush1.msra.mxu0 0.0
        %283 = vmatprep.subr.mxu0 0.0
        %284 = vmatpush1.msra.mxu0 0.0
        %285 = vmatprep.subr.mxu0 0.0
        %286 = vmatpush1.msra.mxu0 0.0
        %287 = vmatprep.subr.mxu0 0.0
        %288 = vmatpush1.msra.mxu0 0.0
        %289 = vmatprep.subr.mxu0 0.0
        %290 = vmatpush1.msra.mxu0 0.0
        %291 = vmatprep.subr.mxu0 0.0
        %292 = vmatpush1.msra.mxu0 0.0
        %293 = vmatprep.subr.mxu0 0.0
        %294 = vmatpush1.msra.mxu0 0.0
        %295 = vmatprep.subr.mxu0 0.0
        %296 = vmatpush1.msra.mxu0 0.0
        %297 = vmatprep.subr.mxu0 0.0
        %298 = vmatpush1.msra.mxu0 0.0
        %299 = vmatprep.subr.mxu0 0.0
        %300 = vmatpush1.msra.mxu0 0.0
        %301 = vmatprep.subr.mxu0 0.0
        %302 = vmatpush1.msra.mxu0 0.0
        %303 = vmatprep.subr.mxu0 0.0
        %304 = vmatpush1.msra.mxu0 0.0
        %305 = vmatprep.subr.mxu0 0.0
        %306 = vmatpush1.msra.mxu0 0.0
        %307 = vmatprep.subr.mxu0 0.0
        %308 = vmatpush1.msra.mxu0 0.0
        %309 = vmatprep.subr.mxu0 0.0
        %310 = vmatpush1.msra.mxu0 0.0
        %311 = vmatprep.subr.mxu0 0.0
        %312 = vmatpush1.msra.mxu0 0.0
        %313 = vmatprep.subr.mxu0 0.0
        %314 = vmatpush1.msra.mxu0 0.0
        %315 = vmatprep.subr.mxu0 0.0
        %316 = vmatpush1.msra.mxu0 0.0
        %317 = vmatprep.mubr.f32.mxu0 0.0
        %318 = vmatmul.mubr.f32.gmra.mrb[0].mxu0 %v251
        %v319 = vpop.f32.mrb[0].mxu0
        %v320 = vadd.f32 %v247, %v319
        %v321 = vpop.f32.mrb[0].mxu0
        %322 = vdwg.mxu0
        %vm323 = vcmask 254976
        %324 = vst.msk [vmem:[%s236] sm:$0x3] %vm323, %v320
        %p325 = scmp.lt.s32.totalorder %s21, 5
        %s326 = scalar_select %p325, %s21, 5
        %p327 = scmp.lt.s32.totalorder %s22, 0
        %s328 = scalar_select %p327, %s22, 0
        %s329 = sadd.s32 %s328, %s326
        %s330 = smul.addr %s329, 2
        %s331 = scalar_lea.vmem %s3, %s330
        // Predicated region
        $region37: #{ada_layer_norm_zero.2} parent=31 // pred_check
          %p332 = pneg %p126
        $region38: #{ada_layer_norm_zero.2} parent=31 // pred_check_branch
          %334 = sbr.rel (%p332) target = $region40
        $region39: #{ada_layer_norm_zero.2} parent=31 // pred_region
          _
        $region40: #{ada_layer_norm_zero.2} parent=31 // pred_fallthru
          _
      $region32: #{ada_layer_norm_zero.2} parent=5 // pred_fallthru
        _
      %p335 = scmp.le.s32.totalorder 2, %s12
      // Predicated region
      $region41: #{ada_layer_norm_zero.2} parent=5 // pred_check
        %p336 = pneg %p335
      $region42: #{ada_layer_norm_zero.2} parent=5 // pred_check_branch
        %338 = sbr.rel (%p336) target = $region44
      $region43: #{ada_layer_norm_zero.2} parent=5 // pred_region
        %s339 = ssub.s32 %s12, 2
        // Predicated region
        $region45: #{ada_layer_norm_zero.2} parent=43 // pred_check
          %p340 = pneg %p132
        $region46: #{ada_layer_norm_zero.2} parent=43 // pred_check_branch
          %342 = sbr.rel (%p340) target = $region48
        $region47: #{ada_layer_norm_zero.2} parent=43 // pred_region
          %p343 = scmp.lt.s32.totalorder %s23, 5
          %s344 = scalar_select %p343, %s23, 5
          %p345 = scmp.lt.s32.totalorder %s24, 0
          %s346 = scalar_select %p345, %s24, 0
          %s347 = sadd.s32 %s346, %s344
          %s348 = smul.addr %s347, 2
          %s349 = scalar_lea.vmem %s3, %s348
        $region48: #{ada_layer_norm_zero.2} parent=43 // pred_fallthru
          _
      $region44: #{ada_layer_norm_zero.2} parent=5 // pred_fallthru
        _
    $region6: #{ada_layer_norm_zero.2} parent=1 // loop_footer
      %s16 = sadd.s32 1, %s12
    $region7: #{ada_layer_norm_zero.2} parent=1 // loop_footer_branch
      %11 = sbr.rel target = $region3
    $region8: #{ada_layer_norm_zero.2} parent=1 // loop_exit
      _
    %350 = vsyncpa [#allocation3], 1
    %s351 = scalar_lea.sflag [#allocation3], 1
    %352 = vsyncpa %s351, 1

// kernel: ada_layer_norm_zero.3
$region0: #{ada_layer_norm_zero.3}
  #allocation0 [shape = 'u32[]', space=smem, size = 0x4, offset = 0x4, fixed_abs, tag = 'smem constant byte address 0x4 - core index']
  #allocation1 [shape = 'u32[144,128]{1,0:T(1,128)}', space=vmem, size = 0x12000, scoped, tag = 'internal scratch']
  %s0 = inlined_call_operand.vmem [shape: f32[2,8,32], index: 0, kind: input, shape index: {}]
  %s1 = inlined_call_operand.vmem [shape: f32[2,1,32], index: 1, kind: input, shape index: {}]
  %s2 = inlined_call_operand.vmem [shape: f32[2,1,32], index: 2, kind: input, shape index: {}]
  %s3 = inlined_call_operand.hbm [shape: f32[2,8,32], index: 3, kind: output, shape index: {}]
  %s4 = sld [smem:[#allocation0]]
  $region45: #{ada_layer_norm_zero.3} parent=0
    _
  %s6 = ssub.s32 1, %s4
  %s7 = scalar_select 0, %s6, %s4
  $region1: #{ada_layer_norm_zero.3} parent=0
    #allocation2 [shape = 'u8[8192]{0}', space=vmem, size = 0x2000, scoped, tag = 'output window, operand 0']
    #allocation3 [shape = 's32[2]{0}', space=sflag, size = 0x8, scoped, tag = 'scoped memory for ada_layer_norm_zero.3']
    %8 = vsyncpa [#allocation3], 0
    %s9 = scalar_lea.sflag [#allocation3], 1
    %10 = vsyncpa %s9, 0
    loop: start=0, step=1, limit=4
    $region2: #{ada_layer_norm_zero.3} parent=1 // loop_pre_header
      _
    $region3: #{ada_layer_norm_zero.3} parent=1 // loop_header
      %s12 = sphi 0, %s16
      %p13 = scmp.ge.s32.totalorder %s12, 4
      %s19 = sphi 0, %s31
      %s20 = sphi 0, %s27
      %s21 = sphi 0, %s19
      %s22 = sphi 0, %s20
      %s23 = sphi 0, %s21
      %s24 = sphi 0, %s22
      %s36 = sphi 0, %s38
      %s39 = sphi 0, %s36
      %s40 = sphi 0, %s39
      %s56 = sphi 0, %s40
      %s62 = sphi 0, %s64
      %s65 = sphi 0, %s62
      %s66 = sphi 0, %s65
      %s82 = sphi 0, %s66
      %s88 = sphi 0, %s90
      %s91 = sphi 0, %s88
      %s92 = sphi 0, %s91
      %s108 = sphi 0, %s92
      %s116 = sphi 0, %s118
      %s119 = sphi 0, %s116
      %s120 = sphi 0, %s119
      %s136 = sphi 0, %s120
    $region4: #{ada_layer_norm_zero.3} parent=1 // loop_header_branch
      %15 = sbr.rel (%p13) target = $region8
    $region5: #{ada_layer_norm_zero.3} parent=1 // loop_body
      %s17 = ssub.s32 %s12, 1
      %s18 = ssub.s32 %s12, 2
      %s25 = sadd.s32 1, %s20
      %p26 = scmp.ge.s32.totalorder %s25, 1
      %s27 = scalar_select %p26, 0, %s25
      %s28 = sadd.s32 1, %s19
      %s29 = scalar_select %p26, %s28, %s19
      %p30 = scmp.ge.s32.totalorder %s29, 2
      %s31 = scalar_select %p30, 0, %s29
      %s32 = ssub.s32 %s19, %s31
      %s33 = ssub.s32 %s20, %s27
      %s34 = sor.u32 %s32, %s33
      %p35 = scmp.eq.s32.totalorder %s34, 0
      %s37 = sadd.s32 %s36, 1
      %s38 = scalar_select %p35, %s36, %s37
      %p41 = pneg %p35
      %p42 = scmp.eq.s32.totalorder %s12, 1
      %p43 = por %p41, %p42
      %p44 = scmp.ne.s32.totalorder %s36, %s39
      %p45 = scmp.eq.s32.totalorder %s12, 0
      %p46 = por %p44, %p45
      %p47 = scmp.ne.s32.totalorder %s36, %s39
      %p48 = scmp.eq.s32.totalorder %s17, 1
      %p49 = por %p47, %p48
      %p50 = scmp.ne.s32.totalorder %s39, %s40
      %p51 = scmp.eq.s32.totalorder %s17, 0
      %p52 = por %p50, %p51
      %p53 = scmp.ne.s32.totalorder %s39, %s40
      %p54 = scmp.eq.s32.totalorder %s18, 1
      %p55 = por %p53, %p54
      %p57 = scmp.ne.s32.totalorder %s40, %s56
      %p58 = scmp.eq.s32.totalorder %s18, 0
      %p59 = por %p57, %p58
      %s60 = ssub.s32 %s19, %s31
      %p61 = scmp.eq.s32.totalorder %s60, 0
      %s63 = sadd.s32 %s62, 1
      %s64 = scalar_select %p61, %s62, %s63
      %p67 = pneg %p61
      %p68 = scmp.eq.s32.totalorder %s12, 1
      %p69 = por %p67, %p68
      %p70 = scmp.ne.s32.totalorder %s62, %s65
      %p71 = scmp.eq.s32.totalorder %s12, 0
      %p72 = por %p70, %p71
      %p73 = scmp.ne.s32.totalorder %s62, %s65
      %p74 = scmp.eq.s32.totalorder %s17, 1
      %p75 = por %p73, %p74
      %p76 = scmp.ne.s32.totalorder %s65, %s66
      %p77 = scmp.eq.s32.totalorder %s17, 0
      %p78 = por %p76, %p77
      %p79 = scmp.ne.s32.totalorder %s65, %s66
      %p80 = scmp.eq.s32.totalorder %s18, 1
      %p81 = por %p79, %p80
      %p83 = scmp.ne.s32.totalorder %s66, %s82
      %p84 = scmp.eq.s32.totalorder %s18, 0
      %p85 = por %p83, %p84
      %s86 = ssub.s32 %s19, %s31
      %p87 = scmp.eq.s32.totalorder %s86, 0
      %s89 = sadd.s32 %s88, 1
      %s90 = scalar_select %p87, %s88, %s89
      %p93 = pneg %p87
      %p94 = scmp.eq.s32.totalorder %s12, 1
      %p95 = por %p93, %p94
      %p96 = scmp.ne.s32.totalorder %s88, %s91
      %p97 = scmp.eq.s32.totalorder %s12, 0
      %p98 = por %p96, %p97
      %p99 = scmp.ne.s32.totalorder %s88, %s91
      %p100 = scmp.eq.s32.totalorder %s17, 1
      %p101 = por %p99, %p100
      %p102 = scmp.ne.s32.totalorder %s91, %s92
      %p103 = scmp.eq.s32.totalorder %s17, 0
      %p104 = por %p102, %p103
      %p105 = scmp.ne.s32.totalorder %s91, %s92
      %p106 = scmp.eq.s32.totalorder %s18, 1
      %p107 = por %p105, %p106
      %p109 = scmp.ne.s32.totalorder %s92, %s108
      %p110 = scmp.eq.s32.totalorder %s18, 0
      %p111 = por %p109, %p110
      %s112 = ssub.s32 %s19, %s31
      %s113 = ssub.s32 %s20, %s27
      %s114 = sor.u32 %s112, %s113
      %p115 = scmp.eq.s32.totalorder %s114, 0
      %s117 = sadd.s32 %s116, 1
      %s118 = scalar_select %p115, %s116, %s117
      %p121 = pneg %p115
      %p122 = scmp.eq.s32.totalorder %s12, 1
      %p123 = por %p121, %p122
      %p124 = scmp.ne.s32.totalorder %s116, %s119
      %p125 = scmp.eq.s32.totalorder %s12, 0
      %p126 = por %p124, %p125
      %p127 = scmp.ne.s32.totalorder %s116, %s119
      %p128 = scmp.eq.s32.totalorder %s17, 1
      %p129 = por %p127, %p128
      %p130 = scmp.ne.s32.totalorder %s119, %s120
      %p131 = scmp.eq.s32.totalorder %s17, 0
      %p132 = por %p130, %p131
      %p133 = scmp.ne.s32.totalorder %s119, %s120
      %p134 = scmp.eq.s32.totalorder %s18, 1
      %p135 = por %p133, %p134
      %p137 = scmp.ne.s32.totalorder %s120, %s136
      %p138 = scmp.eq.s32.totalorder %s18, 0
      %p139 = por %p137, %p138
      %p140 = scmp.le.s32.totalorder 1, %s12
      %p141 = scmp.lt.s32.totalorder %s12, 3
      %p142 = pnand %p140, %p141
      %p143 = pneg %p142
      // Predicated region
      $region9: #{ada_layer_norm_zero.3} parent=5 // pred_check
        _
      $region10: #{ada_layer_norm_zero.3} parent=5 // pred_check_branch
        %145 = sbr.rel (%p142) target = $region12
      $region11: #{ada_layer_norm_zero.3} parent=5 // pred_region
        %s146 = ssub.s32 %s12, 1
      $region12: #{ada_layer_norm_zero.3} parent=5 // pred_fallthru
        _
      %p147 = scmp.lt.s32.totalorder %s12, 2
      // Predicated region
      $region13: #{ada_layer_norm_zero.3} parent=5 // pred_check
        %p148 = pneg %p147
      $region14: #{ada_layer_norm_zero.3} parent=5 // pred_check_branch
        %150 = sbr.rel (%p148) target = $region16
      $region15: #{ada_layer_norm_zero.3} parent=5 // pred_region
        // Predicated region
        $region17: #{ada_layer_norm_zero.3} parent=15 // pred_check
          %p151 = pneg %p46
        $region18: #{ada_layer_norm_zero.3} parent=15 // pred_check_branch
          %153 = sbr.rel (%p151) target = $region20
        $region19: #{ada_layer_norm_zero.3} parent=15 // pred_region
          %p154 = scmp.lt.s32.totalorder %s19, 1
          %s155 = scalar_select %p154, %s19, 1
          %p156 = scmp.lt.s32.totalorder %s20, 0
          %s157 = scalar_select %p156, %s20, 0
          %s158 = sadd.s32 %s157, %s155
          %s159 = smul.addr %s158, 8
          %s160 = scalar_lea.vmem %s0, %s159
        $region20: #{ada_layer_norm_zero.3} parent=15 // pred_fallthru
          _
        // Predicated region
        $region21: #{ada_layer_norm_zero.3} parent=15 // pred_check
          %p161 = pneg %p72
        $region22: #{ada_layer_norm_zero.3} parent=15 // pred_check_branch
          %163 = sbr.rel (%p161) target = $region24
        $region23: #{ada_layer_norm_zero.3} parent=15 // pred_region
          %p164 = scmp.lt.s32.totalorder %s19, 1
          %s165 = scalar_select %p164, %s19, 1
          %s166 = scalar_lea.vmem %s1, %s165
        $region24: #{ada_layer_norm_zero.3} parent=15 // pred_fallthru
          _
        // Predicated region
        $region25: #{ada_layer_norm_zero.3} parent=15 // pred_check
          %p167 = pneg %p98
        $region26: #{ada_layer_norm_zero.3} parent=15 // pred_check_branch
          %169 = sbr.rel (%p167) target = $region28
        $region27: #{ada_layer_norm_zero.3} parent=15 // pred_region
          %p170 = scmp.lt.s32.totalorder %s19, 1
          %s171 = scalar_select %p170, %s19, 1
          %s172 = scalar_lea.vmem %s2, %s171
        $region28: #{ada_layer_norm_zero.3} parent=15 // pred_fallthru
          _
      $region16: #{ada_layer_norm_zero.3} parent=5 // pred_fallthru
        _
      %p173 = scmp.le.s32.totalorder 1, %s12
      %p174 = scmp.lt.s32.totalorder %s12, 3
      %p175 = pnand %p173, %p174
      %p176 = pneg %p175
      // Predicated region
      $region29: #{ada_layer_norm_zero.3} parent=5 // pred_check
        _
      $region30: #{ada_layer_norm_zero.3} parent=5 // pred_check_branch
        %178 = sbr.rel (%p175) target = $region32
      $region31: #{ada_layer_norm_zero.3} parent=5 // pred_region
        %s179 = ssub.s32 %s12, 1
        %p180 = scmp.lt.s32.totalorder %s21, 1
        %s181 = scalar_select %p180, %s21, 1
        %p182 = scmp.lt.s32.totalorder %s22, 0
        %s183 = scalar_select %p182, %s22, 0
        %s184 = sadd.s32 %s183, %s181
        %s185 = smul.addr %s184, 8
        %s186 = scalar_lea.vmem %s0, %s185
        %p187 = pneg %p52
        %p188 = pneg %p49
        %p189 = scmp.lt.s32.totalorder %s21, 1
        %s190 = scalar_select %p189, %s21, 1
        %s191 = scalar_lea.vmem %s1, %s190
        %p192 = pneg %p78
        %p193 = pneg %p75
        %p194 = scmp.lt.s32.totalorder %s21, 1
        %s195 = scalar_select %p194, %s21, 1
        %s196 = scalar_lea.vmem %s2, %s195
        %p197 = pneg %p104
        %p198 = pneg %p101
        %p199 = pneg %p132
        %p200 = pneg %p129
        %s201 = sand.u32 %s119, 1
        %s202 = scalar_lea.sflag [#allocation3], %s201
        %s203 = sand.u32 %s119, 1
        %s204 = smul.addr %s203, 8
        %s205 = scalar_lea.vmem [#allocation2], %s204
        %p206 = scmp.lt.s32.totalorder %s21, 1
        %s207 = scalar_select %p206, %s21, 1
        %p208 = scmp.lt.s32.totalorder %s22, 0
        %s209 = scalar_select %p208, %s22, 0
        %s210 = sadd.s32 %s209, %s207
        %s211 = smul.addr %s210, 8
        %s212 = scalar_lea.vmem %s0, %s211
        %p213 = scmp.lt.s32.totalorder %s21, 1
        %s214 = scalar_select %p213, %s21, 1
        %s215 = scalar_lea.vmem %s1, %s214
        %p216 = scmp.lt.s32.totalorder %s21, 1
        %s217 = scalar_select %p216, %s21, 1
        %s218 = scalar_lea.vmem %s2, %s217
        %v219 = vld [vmem:[%s212] sm:$0xff]
        %vm220 = vcmask 261120
        %v221 = vsel %vm220, %v219, 0.0
        %222 = vadd.xlane.f32.xlu0 %v221
        %v223 = vpop.xlane.xlu0 %222
        %v224 = vmul.f32 %v219, %v219
        %v225 = vsel %vm220, %v224, 0.0
        %226 = vadd.xlane.f32.xlu0 %v225
        %v227 = vpop.xlane.xlu0 %226
        %v228 = vmul.f32 %v223, 0.03125
        %v229 = vmul.f32 %v227, 0.03125
        %v230 = vmul.f32 %v228, %v228
        %v231 = vsub.f32 %v229, %v230
        %v232 = vadd.f32 %v231, 1e-06
        %v233 = vrsqrt.pop %v232
        %v234 = vld [vmem:[%s218] sm:$0x1]
        %v235 = vadd.f32 %v234, 1.0
        %v236 = vld [vmem:[%s215] sm:$0x1]
        %v237 = vmul.f32 %v219, %v233
        %v238 = vmul.f32 %v228, %v233
        %v239 = vsub.f32 %v237, %v238
        %v241 = vlaneseq
        %v242 = vshrl.u32 %v241, 7
        %v243 = vsub.s32 0, %v242
        %v244 = vrot.slane %v235, %v243
        %v246 = vmul.f32 %v239, %v244
        %v248 = vlaneseq
        %v249 = vshrl.u32 %v248, 7
        %v250 = vsub.s32 0, %v249
        %v251 = vrot.slane %v236, %v250
        %v253 = vadd.f32 %v246, %v251
        %254 = vst.msk [vmem:[%s205] sm:$0xff] %vm220, %v253
        %s255 = sand.u32 %s119, 1
        %s256 = scalar_lea.sflag [#allocation3], %s255
        %s257 = sand.u32 %s119, 1
        %s258 = smul.addr %s257, 8
        %s259 = scalar_lea.vmem [#allocation2], %s258
        // Predicated region
        $region33: #{ada_layer_norm_zero.3} parent=31 // pred_check
          %p260 = pneg %p129
        $region34: #{ada_layer_norm_zero.3} parent=31 // pred_check_branch
          %262 = sbr.rel (%p260) target = $region36
        $region35: #{ada_layer_norm_zero.3} parent=31 // pred_region
          %s264 = ssub.s32 128, 128
          %265 = vsyncadd %s256, %s264
          %s266 = sadd.s32 %s22, %s21
          %s267 = smul.addr %s266, 128
          %s268 = scalar_lea.hbm %s3, %s267
          %s270 = sshll.u32 %s259, 4
          %s271 = int_to_ptr.vmem [resolvable:$true] %s270
          %273 = dma.vmem_to_hbm [thread:$0]  %s271, 128, %s268, %s256
        $region36: #{ada_layer_norm_zero.3} parent=31 // pred_fallthru
          _
      $region32: #{ada_layer_norm_zero.3} parent=5 // pred_fallthru
        _
      %p274 = scmp.le.s32.totalorder 2, %s12
      // Predicated region
      $region37: #{ada_layer_norm_zero.3} parent=5 // pred_check
        %p275 = pneg %p274
      $region38: #{ada_layer_norm_zero.3} parent=5 // pred_check_branch
        %277 = sbr.rel (%p275) target = $region40
      $region39: #{ada_layer_norm_zero.3} parent=5 // pred_region
        %s278 = ssub.s32 %s12, 2
        // Predicated region
        $region41: #{ada_layer_norm_zero.3} parent=39 // pred_check
          %p279 = pneg %p135
        $region42: #{ada_layer_norm_zero.3} parent=39 // pred_check_branch
          %281 = sbr.rel (%p279) target = $region44
        $region43: #{ada_layer_norm_zero.3} parent=39 // pred_region
          %s282 = sand.u32 %s120, 1
          %s283 = scalar_lea.sflag [#allocation3], %s282
          %s284 = sand.u32 %s120, 1
          %s285 = smul.addr %s284, 8
          %s286 = scalar_lea.vmem [#allocation2], %s285
          %287 = dma.done %s283, 128
        $region44: #{ada_layer_norm_zero.3} parent=39 // pred_fallthru
          _
      $region40: #{ada_layer_norm_zero.3} parent=5 // pred_fallthru
        _
    $region6: #{ada_layer_norm_zero.3} parent=1 // loop_footer
      %s16 = sadd.s32 1, %s12
    $region7: #{ada_layer_norm_zero.3} parent=1 // loop_footer_branch
      %11 = sbr.rel target = $region3
    $region8: #{ada_layer_norm_zero.3} parent=1 // loop_exit
      _
    %288 = vsyncpa [#allocation3], 1
    %s289 = scalar_lea.sflag [#allocation3], 1
    %290 = vsyncpa %s289, 1

</llo_original>
